<compile_context>
chip_gen: v7x
topology: tpu7x:2x2x1
jax: 0.10.0
libtpu: 0.0.40
codegen_flags: <defaults>
</compile_context>

<pallas_src>
import jax
import jax.numpy as jnp
from jax import lax
from jax.experimental import pallas as pl
from jax.experimental.pallas import tpu as pltpu

S_DIM = 1
A_DIM = 2
HIDDEN = 30
OUT_DIM = 1

LANES = 128
SUBLANES = 8
TR_MAX = 256            # rows of 128 lanes per grid step -> 32768 elems/step

# Flat SMEM weight layout (offsets into the 1-D f32 slab).
_WS = 0                 # ws[j]           (fcs weight, s column)
_WA0 = HIDDEN           # wa[j, 0]        (fca weight, a0 column)
_WA1 = 2 * HIDDEN       # wa[j, 1]        (fca weight, a1 column)
_B1 = 3 * HIDDEN        # bs[j] + ba[j]   (fused first-layer bias)
_WO = 4 * HIDDEN        # wo[j]           (output weight)
_BO = 5 * HIDDEN        # bo              (output bias)
W_LEN = 5 * HIDDEN + 1


def _critic_kernel(w_ref, s_ref, a0_ref, a1_ref, q_ref):
    """Batch-on-lanes VPU evaluation of the 3 -> 30 -> 1 MLP.

    w_ref : (W_LEN,) f32 in SMEM (resident across all grid steps)
    s_ref, a0_ref, a1_ref, q_ref : (TR, 128) f32 VMEM tiles (batch on
    sublane x lane); q_ref doubles as the per-lane accumulator.
    """
    q_ref[...] = jnp.zeros_like(q_ref)

    def body(j, carry):
        # Hidden unit j: scalar weights broadcast from SMEM, pure VPU work.
        h = (s_ref[...] * w_ref[_WS + j]
             + a0_ref[...] * w_ref[_WA0 + j]
             + a1_ref[...] * w_ref[_WA1 + j]
             + w_ref[_B1 + j])
        q_ref[...] += jnp.maximum(h, 0.0) * w_ref[_WO + j]
        return carry

    lax.fori_loop(0, HIDDEN, body, None)
    q_ref[...] = q_ref[...] + w_ref[_BO]


def prepare_params(params):
    """One-time packing of the PyTorch-layout parameters into a flat 1-D
    f32 slab consumed from SMEM by the kernel (bias fusion included)."""
    ws, bs = params["ws"], params["bs"]          # (30,1), (30,)
    wa, ba = params["wa"], params["ba"]          # (30,2), (30,)
    wo, bo = params["wo"], params["bo"]          # (1,30), (1,)
    w = jnp.zeros((W_LEN,), jnp.float32)
    w = w.at[_WS:_WS + HIDDEN].set(ws[:, 0])
    w = w.at[_WA0:_WA0 + HIDDEN].set(wa[:, 0])
    w = w.at[_WA1:_WA1 + HIDDEN].set(wa[:, 1])
    w = w.at[_B1:_B1 + HIDDEN].set(bs + ba)
    w = w.at[_WO:_WO + HIDDEN].set(wo[0, :])
    w = w.at[_BO].set(bo[0])
    return w


@jax.jit
def critic_forward(s, a, w_flat):
    """s: (B, S_DIM) f32, a: (B, A_DIM) f32 -> (B, 1) f32."""
    B = s.shape[0]

    # Static (trace-time) batch tiling: batch maps to (sublane, lane), each
    # grid step handles a lane-dense (TR, 128) tile = TR*128 elements.
    elems_per_step = TR_MAX * LANES
    if B <= elems_per_step:
        rows = -(-B // LANES)                              # ceil(B/128)
        TR = max(SUBLANES, -(-rows // SUBLANES) * SUBLANES)
        grid_n = 1
    else:
        TR = TR_MAX
        grid_n = -(-B // elems_per_step)
    Bp = grid_n * TR * LANES
    nrows = Bp // LANES

    def to_tiles(v):                                       # (B,) -> (nrows, 128)
        v = v.astype(jnp.float32)
        v = jnp.pad(v, (0, Bp - B))
        return v.reshape(nrows, LANES)

    s1 = to_tiles(s.reshape(B))
    a0 = to_tiles(a[:, 0])
    a1 = to_tiles(a[:, 1])

    tile_spec = pl.BlockSpec((TR, LANES), lambda i: (i, 0))

    q = pl.pallas_call(
        _critic_kernel,
        out_shape=jax.ShapeDtypeStruct((nrows, LANES), jnp.float32),
        grid=(grid_n,),
        in_specs=[
            pl.BlockSpec(memory_space=pltpu.MemorySpace.SMEM),  # weights (resident)
            tile_spec,                                          # s
            tile_spec,                                          # a0
            tile_spec,                                          # a1
        ],
        out_specs=tile_spec,
        compiler_params=pltpu.CompilerParams(
            dimension_semantics=("parallel",)),
    )(w_flat, s1, a0, a1)

    return q.reshape(Bp)[:B].reshape(B, OUT_DIM)


def init_params(key):
    """Deterministic init mimicking the PyTorch module:
    weights ~ N(0, 0.1), biases ~ U(-1/sqrt(fan_in), 1/sqrt(fan_in))."""
    k = jax.random.split(key, 6)
    ws = 0.1 * jax.random.normal(k[0], (HIDDEN, S_DIM), jnp.float32)
    wa = 0.1 * jax.random.normal(k[1], (HIDDEN, A_DIM), jnp.float32)
    wo = 0.1 * jax.random.normal(k[2], (OUT_DIM, HIDDEN), jnp.float32)
    bs = jax.random.uniform(k[3], (HIDDEN,), jnp.float32,
                            -1.0 / S_DIM ** 0.5, 1.0 / S_DIM ** 0.5)
    ba = jax.random.uniform(k[4], (HIDDEN,), jnp.float32,
                            -1.0 / A_DIM ** 0.5, 1.0 / A_DIM ** 0.5)
    bo = jax.random.uniform(k[5], (OUT_DIM,), jnp.float32,
                            -1.0 / HIDDEN ** 0.5, 1.0 / HIDDEN ** 0.5)
    return dict(ws=ws, bs=bs, wa=wa, ba=ba, wo=wo, bo=bo)


def _reference(s, a, p):
    x = s @ p["ws"].T + p["bs"]
    y = a @ p["wa"].T + p["ba"]
    return jnp.maximum(x + y, 0.0) @ p["wo"].T + p["bo"]


if __name__ == "__main__":
    key = jax.random.PRNGKey(0)
    kp, kd = jax.random.split(key)
    params = init_params(kp)
    w_flat = prepare_params(params)     # done once, outside the forward path

    # B=4: small single-block case.  B=2053: padding within one block.
    # B=70000: exercises the multi-step "parallel" grid (grid_n = 3).
    for B in (4, 2053, 70000):
        ks, ka = jax.random.split(jax.random.fold_in(kd, B))
        s = jax.random.normal(ks, (B, S_DIM), jnp.float32)
        a = jax.random.normal(ka, (B, A_DIM), jnp.float32)
        q = jax.block_until_ready(critic_forward(s, a, w_flat))
        q_ref = _reference(s, a, params)
        assert q.shape == (B, OUT_DIM)
        assert jnp.allclose(q, q_ref, atol=1e-4, rtol=1e-4), (
            B, float(jnp.max(jnp.abs(q - q_ref))))

    print("KERNEL_OK")
</pallas_src>

<mosaic_0001>
module attributes {stable_mosaic.version = 11 : i64} {
  func.func @_critic_kernel(%arg0: i32, %arg1: memref<151xf32, #tpu.memory_space<smem>>, %arg2: memref<8x128xf32, #tpu.memory_space<vmem>>, %arg3: memref<8x128xf32, #tpu.memory_space<vmem>>, %arg4: memref<8x128xf32, #tpu.memory_space<vmem>>, %arg5: memref<8x128xf32, #tpu.memory_space<vmem>>) attributes {dimension_semantics = [#tpu.dimension_semantics<parallel>], iteration_bounds = array<i64: 1>, scalar_prefetch = 0 : i64, scratch_operands = 0 : i64, tpu.core_type = #tpu.core_type<tc>, window_params = [{transform_indices = @transform_0, window_bounds = array<i64: 151>}, {transform_indices = @transform_1, window_bounds = array<i64: 8, 128>}, {transform_indices = @transform_2, window_bounds = array<i64: 8, 128>}, {transform_indices = @transform_3, window_bounds = array<i64: 8, 128>}, {transform_indices = @transform_4, window_bounds = array<i64: 8, 128>}]} {
    %cst = arith.constant 0.000000e+00 : f32
    %0 = vector.broadcast %cst : f32 to vector<8x128xf32>
    %c0 = arith.constant 0 : index
    %c0_0 = arith.constant 0 : index
    %1 = vector.load %arg5[%c0, %c0_0] : memref<8x128xf32, #tpu.memory_space<vmem>>, vector<8x128xf32>
    tpu.vector_store %arg5[%c0, %c0_0], %0 {strides = array<i32>} : memref<8x128xf32, #tpu.memory_space<vmem>>, vector<8x128xf32>,
    %c0_i32 = arith.constant 0 : i32
    %c30_i32 = arith.constant 30 : i32
    %2 = arith.addi %c0_i32, %c30_i32 : i32
    %c1_i32 = arith.constant 1 : i32
    scf.for %arg6 = %c0_i32 to %2 step %c1_i32  : i32 {
      %c0_6 = arith.constant 0 : index
      %c0_7 = arith.constant 0 : index
      %8 = vector.load %arg2[%c0_6, %c0_7] : memref<8x128xf32, #tpu.memory_space<vmem>>, vector<8x128xf32>
      %c0_i32_8 = arith.constant 0 : i32
      %9 = arith.addi %c0_i32_8, %arg6 : i32
      %10 = arith.index_cast %9 : i32 to index
      %11 = memref.load %arg1[%10] : memref<151xf32, #tpu.memory_space<smem>>
      %12 = vector.broadcast %11 : f32 to vector<8x128xf32>
      %13 = arith.mulf %8, %12 : vector<8x128xf32>
      %c0_9 = arith.constant 0 : index
      %c0_10 = arith.constant 0 : index
      %14 = vector.load %arg3[%c0_9, %c0_10] : memref<8x128xf32, #tpu.memory_space<vmem>>, vector<8x128xf32>
      %c30_i32_11 = arith.constant 30 : i32
      %15 = arith.addi %c30_i32_11, %arg6 : i32
      %16 = arith.index_cast %15 : i32 to index
      %17 = memref.load %arg1[%16] : memref<151xf32, #tpu.memory_space<smem>>
      %18 = vector.broadcast %17 : f32 to vector<8x128xf32>
      %19 = arith.mulf %14, %18 : vector<8x128xf32>
      %20 = arith.addf %13, %19 : vector<8x128xf32>
      %c0_12 = arith.constant 0 : index
      %c0_13 = arith.constant 0 : index
      %21 = vector.load %arg4[%c0_12, %c0_13] : memref<8x128xf32, #tpu.memory_space<vmem>>, vector<8x128xf32>
      %c60_i32 = arith.constant 60 : i32
      %22 = arith.addi %c60_i32, %arg6 : i32
      %23 = arith.index_cast %22 : i32 to index
      %24 = memref.load %arg1[%23] : memref<151xf32, #tpu.memory_space<smem>>
      %25 = vector.broadcast %24 : f32 to vector<8x128xf32>
      %26 = arith.mulf %21, %25 : vector<8x128xf32>
      %27 = arith.addf %20, %26 : vector<8x128xf32>
      %c90_i32 = arith.constant 90 : i32
      %28 = arith.addi %c90_i32, %arg6 : i32
      %29 = arith.index_cast %28 : i32 to index
      %30 = memref.load %arg1[%29] : memref<151xf32, #tpu.memory_space<smem>>
      %31 = vector.broadcast %30 : f32 to vector<8x128xf32>
      %32 = arith.addf %27, %31 : vector<8x128xf32>
      %c0_14 = arith.constant 0 : index
      %c0_15 = arith.constant 0 : index
      %33 = vector.load %arg5[%c0_14, %c0_15] : memref<8x128xf32, #tpu.memory_space<vmem>>, vector<8x128xf32>
      %cst_16 = arith.constant 0.000000e+00 : f32
      %34 = vector.broadcast %cst_16 : f32 to vector<8x128xf32>
      %35 = arith.maximumf %32, %34 : vector<8x128xf32>
      %c120_i32 = arith.constant 120 : i32
      %36 = arith.addi %c120_i32, %arg6 : i32
      %37 = arith.index_cast %36 : i32 to index
      %38 = memref.load %arg1[%37] : memref<151xf32, #tpu.memory_space<smem>>
      %39 = vector.broadcast %38 : f32 to vector<8x128xf32>
      %40 = arith.mulf %35, %39 : vector<8x128xf32>
      %41 = arith.addf %33, %40 : vector<8x128xf32>
      %c0_17 = arith.constant 0 : index
      %c0_18 = arith.constant 0 : index
      %42 = vector.load %arg5[%c0_17, %c0_18] : memref<8x128xf32, #tpu.memory_space<vmem>>, vector<8x128xf32>
      tpu.vector_store %arg5[%c0_17, %c0_18], %41 {strides = array<i32>} : memref<8x128xf32, #tpu.memory_space<vmem>>, vector<8x128xf32>,
    }
    %c30_i32_1 = arith.constant 30 : i32
    %c0_2 = arith.constant 0 : index
    %c0_3 = arith.constant 0 : index
    %3 = vector.load %arg5[%c0_2, %c0_3] : memref<8x128xf32, #tpu.memory_space<vmem>>, vector<8x128xf32>
    %c150 = arith.constant 150 : index
    %4 = memref.load %arg1[%c150] : memref<151xf32, #tpu.memory_space<smem>>
    %5 = vector.broadcast %4 : f32 to vector<8x128xf32>
    %6 = arith.addf %3, %5 : vector<8x128xf32>
    %c0_4 = arith.constant 0 : index
    %c0_5 = arith.constant 0 : index
    %7 = vector.load %arg5[%c0_4, %c0_5] : memref<8x128xf32, #tpu.memory_space<vmem>>, vector<8x128xf32>
    tpu.vector_store %arg5[%c0_4, %c0_5], %6 {strides = array<i32>} : memref<8x128xf32, #tpu.memory_space<vmem>>, vector<8x128xf32>,
    return
  }
  func.func @transform_0(%arg0: i32) -> i32 {
    %c0_i32 = arith.constant 0 : i32
    %c0_i32_0 = arith.constant 0 : i32
    return %c0_i32 : i32
  }
  func.func @transform_1(%arg0: i32) -> (i32, i32) {
    %c0_i32 = arith.constant 0 : i32
    %c0_i32_0 = arith.constant 0 : i32
    return %arg0, %c0_i32 : i32, i32
  }
  func.func @transform_2(%arg0: i32) -> (i32, i32) {
    %c0_i32 = arith.constant 0 : i32
    %c0_i32_0 = arith.constant 0 : i32
    return %arg0, %c0_i32 : i32, i32
  }
  func.func @transform_3(%arg0: i32) -> (i32, i32) {
    %c0_i32 = arith.constant 0 : i32
    %c0_i32_0 = arith.constant 0 : i32
    return %arg0, %c0_i32 : i32, i32
  }
  func.func @transform_4(%arg0: i32) -> (i32, i32) {
    %c0_i32 = arith.constant 0 : i32
    %c0_i32_0 = arith.constant 0 : i32
    return %arg0, %c0_i32 : i32, i32
  }
}

</mosaic_0001>

<llo_original>
// kernel: critic_forward.1
$region0: #{critic_forward.1}
  #allocation0 [shape = 'u32[]', space=smem, size = 0x4, offset = 0x4, fixed_abs, tag = 'smem constant byte address 0x4 - core index']
  #allocation1 [shape = 'u32[144,128]{1,0:T(1,128)}', space=vmem, size = 0x12000, scoped, tag = 'internal scratch']
  %s0 = inlined_call_operand.vmem [shape: f32[151], index: 0, kind: input, shape index: {}]
  %s1 = inlined_call_operand.vmem [shape: f32[8,128], index: 1, kind: input, shape index: {}]
  %s2 = inlined_call_operand.vmem [shape: f32[8,128], index: 2, kind: input, shape index: {}]
  %s3 = inlined_call_operand.vmem [shape: f32[8,128], index: 3, kind: input, shape index: {}]
  %s4 = inlined_call_operand.vmem [shape: f32[8,128], index: 4, kind: output, shape index: {}]
  %s5 = sld [smem:[#allocation0]]
  $region37: #{critic_forward.1} parent=0
    _
  %s7 = ssub.s32 1, %s5
  %s8 = scalar_select 0, %s7, %s5
  $region1: #{critic_forward.1} parent=0
    #allocation2 [shape = 'u8[1024]{0}', space=smem, size = 0x400, scoped, tag = 'input window, operand 0, single buffered']
    #allocation3 [shape = 's32[1]{0}', space=sflag, size = 0x4, scoped, tag = 'scoped memory for critic_forward.1']
    %9 = vsyncpa [#allocation3], 0
    // Predicated region
    $region2: #{critic_forward.1} parent=1 // pred_check
      _
    $region3: #{critic_forward.1} parent=1 // pred_check_branch
      %11 = sbr.rel (0) target = $region5
    $region4: #{critic_forward.1} parent=1 // pred_region
      %s13 = ssub.s32 32, 32
      %14 = vsyncadd [#allocation3], %s13
      %s16 = sshll.u32 %s0, 4
      %s17 = int_to_ptr.vmem [resolvable:$true] %s16
      %19 = dma.vmem_to_smem %s17, 32, [#allocation2], [#allocation3]
    $region5: #{critic_forward.1} parent=1 // pred_fallthru
      _
    // Predicated region
    $region6: #{critic_forward.1} parent=1 // pred_check
      _
    $region7: #{critic_forward.1} parent=1 // pred_check_branch
      %21 = sbr.rel (0) target = $region9
    $region8: #{critic_forward.1} parent=1 // pred_region
      _
    $region9: #{critic_forward.1} parent=1 // pred_fallthru
      _
    // Predicated region
    $region10: #{critic_forward.1} parent=1 // pred_check
      _
    $region11: #{critic_forward.1} parent=1 // pred_check_branch
      %23 = sbr.rel (0) target = $region13
    $region12: #{critic_forward.1} parent=1 // pred_region
      _
    $region13: #{critic_forward.1} parent=1 // pred_fallthru
      _
    // Predicated region
    $region14: #{critic_forward.1} parent=1 // pred_check
      _
    $region15: #{critic_forward.1} parent=1 // pred_check_branch
      %25 = sbr.rel (0) target = $region17
    $region16: #{critic_forward.1} parent=1 // pred_region
      _
    $region17: #{critic_forward.1} parent=1 // pred_fallthru
      _
    // Predicated region
    $region18: #{critic_forward.1} parent=1 // pred_check
      _
    $region19: #{critic_forward.1} parent=1 // pred_check_branch
      %27 = sbr.rel (0) target = $region21
    $region20: #{critic_forward.1} parent=1 // pred_region
      %28 = dma.done [#allocation3], 32
    $region21: #{critic_forward.1} parent=1 // pred_fallthru
      _
    %29 = sfence
    %30 = vst [vmem:[%s4] sm:$0xff] 0.0
    loop: start=0, step=1, limit=30
    $region22: #{critic_forward.1} parent=1 // loop_pre_header
      _
    $region23: #{critic_forward.1} parent=1 // loop_header
      %s32 = sphi 0, %s36
      %p33 = scmp.ge.s32.totalorder %s32, 30
    $region24: #{critic_forward.1} parent=1 // loop_header_branch
      %35 = sbr.rel (%p33) target = $region28
    $region25: #{critic_forward.1} parent=1 // loop_body
      %v37 = vld [vmem:[%s1] sm:$0xff]
      %s38 = sld [smem:[#allocation2 + %s32]]
      %v39 = vstv %s38
      %v40 = vmul.f32 %v37, %v39
      %v41 = vld [vmem:[%s2] sm:$0xff]
      %s42 = sadd.s32 %s32, 30
      %s43 = sld [smem:[#allocation2 + %s42]]
      %v44 = vstv %s43
      %v45 = vmul.f32 %v41, %v44
      %v46 = vadd.f32 %v40, %v45
      %v47 = vld [vmem:[%s3] sm:$0xff]
      %s48 = sadd.s32 %s32, 60
      %s49 = sld [smem:[#allocation2 + %s48]]
      %v50 = vstv %s49
      %v51 = vmul.f32 %v47, %v50
      %v52 = vadd.f32 %v46, %v51
      %s53 = sadd.s32 %s32, 90
      %s54 = sld [smem:[#allocation2 + %s53]]
      %v55 = vstv %s54
      %v56 = vadd.f32 %v52, %v55
      %v57 = vld [vmem:[%s4] sm:$0xff]
      %v58 = vmax.f32 %v56, 0.0
      %s59 = sadd.s32 %s32, 120
      %s60 = sld [smem:[#allocation2 + %s59]]
      %v61 = vstv %s60
      %v62 = vmul.f32 %v58, %v61
      %v63 = vadd.f32 %v57, %v62
      %64 = vst [vmem:[%s4] sm:$0xff] %v63
    $region26: #{critic_forward.1} parent=1 // loop_footer
      %s36 = sadd.s32 1, %s32
    $region27: #{critic_forward.1} parent=1 // loop_footer_branch
      %31 = sbr.rel target = $region23
    $region28: #{critic_forward.1} parent=1 // loop_exit
      _
    %v65 = vld [vmem:[%s4] sm:$0xff]
    %s66 = sld [smem:[#allocation2 + $0x96]]
    %v67 = vstv %s66
    %v68 = vadd.f32 %v65, %v67
    %69 = vst [vmem:[%s4] sm:$0xff] %v68
    // Predicated region
    $region29: #{critic_forward.1} parent=1 // pred_check
      _
    $region30: #{critic_forward.1} parent=1 // pred_check_branch
      %71 = sbr.rel (0) target = $region32
    $region31: #{critic_forward.1} parent=1 // pred_region
      _
    $region32: #{critic_forward.1} parent=1 // pred_fallthru
      _
    // Predicated region
    $region33: #{critic_forward.1} parent=1 // pred_check
      _
    $region34: #{critic_forward.1} parent=1 // pred_check_branch
      %73 = sbr.rel (0) target = $region36
    $region35: #{critic_forward.1} parent=1 // pred_region
      _
    $region36: #{critic_forward.1} parent=1 // pred_fallthru
      _
    %74 = vsyncpa [#allocation3], 1

</llo_original>
